<compile_context>
chip_gen: v7x
topology: tpu7x:2x2x1
jax: 0.10.0
libtpu: 0.0.40
codegen_flags: <defaults>
</compile_context>

<pallas_src>
import jax
import jax.numpy as jnp
import numpy as np
from jax.experimental import pallas as pl
from jax.experimental.pallas import tpu as pltpu


def _round_up(x, m):
    return ((x + m - 1) // m) * m


def _build_layer_dims(num_inputs, nvec_outputs, shared_sizes, critic_sizes, actor_sizes):
    """Replicates the layer-size bookkeeping of ActorCritic.__init__."""
    shared_dims = []
    last = num_inputs
    for s in shared_sizes:
        shared_dims.append((last, s))
        last = s
    shared_last = last

    critic_dims = []
    last = shared_last
    for s in critic_sizes:
        critic_dims.append((last, s))
        last = s
    critic_dims.append((last, 1))  # final value head (no ReLU)

    actor_dims = []
    last = shared_last
    for s in actor_sizes:
        actor_dims.append((last, s))
        last = s
    actor_dims.append((last, int(sum(nvec_outputs))))  # final logits head (no ReLU)

    return shared_dims, critic_dims, actor_dims


def _init_params(key, dims_list):
    """init_weights: W ~ Normal(0, 0.1), b = 0.1 (deterministic given key)."""
    params = []
    for (din, dout) in dims_list:
        key, wk = jax.random.split(key)
        w = 0.1 * jax.random.normal(wk, (din, dout), dtype=jnp.float32)
        b = jnp.full((1, dout), 0.1, dtype=jnp.float32)
        params.append((w, b))
    return key, params


def _pad_layer(w, b, padded):
    """Zero-pad a (din, dout) weight to (P, P) and a (1, dout) bias to (8, P)."""
    din, dout = w.shape
    wp = jnp.zeros((padded, padded), jnp.float32).at[:din, :dout].set(w)
    bp = jnp.zeros((8, padded), jnp.float32).at[0:1, :dout].set(b)
    return wp, bp


def _make_kernel(n_shared, n_fused, n_critic, n_actor, nvec, n_logits, padded, din0):
    """Kernel factory; all layer counts / group sizes / lane layout are static."""
    fused = n_fused > 0
    value_lane = n_logits  # value sits right after the logits lanes

    def kernel(x_ref, w_ref, b_ref, out_ref):
        def linear(h, li, relu, w_rows):
            # Static sublane slice of the weight: full (P) rows for interior
            # layers, num_inputs rows for the first layer (x arrives unpadded).
            w = w_ref[li, 0:w_rows, :]
            y = jnp.dot(h, w, preferred_element_type=jnp.float32) + b_ref[li, 0:1, :]
            return jnp.maximum(y, 0.0) if relu else y

        h = x_ref[...]          # (B, din0) — unpadded input, no host-side pad
        h_rows = din0           # valid weight rows for the next matmul on h

        li = 0
        for _ in range(n_shared):          # shared trunk: Linear + ReLU
            h = linear(h, li, relu=True, w_rows=h_rows)
            h_rows = padded
            li += 1

        if fused:
            # fused critic+actor chain; last layer output layout:
            #   lanes [0, n_logits) = actor logits, lane n_logits = critic value
            y = h
            rows = h_rows
            for i in range(n_fused):
                y = linear(y, li, relu=(i < n_fused - 1), w_rows=rows)
                rows = padded
                li += 1
        else:
            c = h
            rows = h_rows
            for i in range(n_critic):
                c = linear(c, li, relu=(i < n_critic - 1), w_rows=rows)
                rows = padded
                li += 1
            a = h
            rows = h_rows
            for i in range(n_actor):
                a = linear(a, li, relu=(i < n_actor - 1), w_rows=rows)
                rows = padded
                li += 1
            lane_nf = jax.lax.broadcasted_iota(jnp.int32, (1, padded), 1)
            y = jnp.where(lane_nf == value_lane, c[:, 0:1], a)

        # Masked per-group log-softmax over the full padded width.
        # Accumulate one per-lane normalizer `corr` across groups, then apply it
        # with a single final where (no chained per-group rewrites of `out`).
        lane = jax.lax.broadcasted_iota(jnp.int32, (1, padded), 1)
        corr = jnp.zeros_like(y)
        start = 0
        for n in nvec:
            mask = (lane >= start) & (lane < start + n)
            z = jnp.where(mask, y, -jnp.inf)
            m = jnp.max(z, axis=-1, keepdims=True)
            s = jnp.sum(jnp.exp(z - m), axis=-1, keepdims=True)
            corr = corr + jnp.where(mask, m + jnp.log(s), 0.0)
            start += n

        logits_mask = lane < n_logits
        out_ref[...] = jnp.where(logits_mask, y - corr, y)  # one lane-dense store

    return kernel


class ActorCriticPallas:
    def __init__(self, num_inputs, nvec_outputs, shared_sizes, critic_sizes,
                 actor_sizes, key):
        self.nvec = [int(n) for n in nvec_outputs]
        assert all(n > 0 for n in self.nvec), "empty Categorical group (nvec entry 0)"
        self.num_inputs = int(num_inputs)
        n_logits = int(sum(self.nvec))

        shared_dims, critic_dims, actor_dims = _build_layer_dims(
            self.num_inputs, self.nvec, list(shared_sizes), list(critic_sizes),
            list(actor_sizes))

        key, self.shared_params = _init_params(key, shared_dims)
        key, self.critic_params = _init_params(key, critic_dims)
        key, self.actor_params = _init_params(key, actor_dims)

        n_shared = len(self.shared_params)
        n_critic = len(self.critic_params)
        n_actor = len(self.actor_params)
        fused = (n_critic == n_actor)

        # Padded lane width: one width for every (possibly fused) layer.
        widths = [self.num_inputs] + [d for (_, d) in shared_dims]
        if fused:
            widths += [actor_dims[i][1] + critic_dims[i][1] for i in range(n_actor)]
        else:
            widths += [d for (_, d) in critic_dims] + [d for (_, d) in actor_dims]
            widths += [n_logits + 1]
        padded = _round_up(max(widths), 128)
        din0 = _round_up(self.num_inputs, 8)     # x is passed to the kernel this wide
        self._padded = padded
        self._din0 = din0

        # --- pack (and fuse) parameters into one weight slab + one bias slab ---
        packed = []
        for (w, b) in self.shared_params:
            packed.append((w, b))
        if fused:
            for i in range(n_actor):
                wa, ba = self.actor_params[i]
                wc, bc = self.critic_params[i]
                if i == 0:
                    # both heads read the shared features: concat along out-features
                    W = jnp.concatenate([wa, wc], axis=1)
                else:
                    # independent chains: block-diagonal weight (actor block first)
                    a_in, a_out = wa.shape
                    c_in, c_out = wc.shape
                    W = jnp.zeros((a_in + c_in, a_out + c_out), jnp.float32)
                    W = W.at[:a_in, :a_out].set(wa)
                    W = W.at[a_in:, a_out:].set(wc)
                B = jnp.concatenate([ba, bc], axis=1)
                packed.append((W, B))
        else:
            packed += list(self.critic_params) + list(self.actor_params)

        padded_layers = [_pad_layer(w, b, padded) for (w, b) in packed]
        self.w_all = jnp.stack([w for (w, _) in padded_layers])   # (L, P, P)
        self.b_all = jnp.stack([b for (_, b) in padded_layers])   # (L, 8, P)

        kernel = _make_kernel(
            n_shared,
            n_actor if fused else 0,
            0 if fused else n_critic,
            0 if fused else n_actor,
            tuple(self.nvec), n_logits, padded, din0)

        nvec = tuple(self.nvec)
        vmem = pl.BlockSpec(memory_space=pltpu.MemorySpace.VMEM)

        def _forward(xp, w_all, b_all):
            Bp = xp.shape[0]
            L = w_all.shape[0]
            bytes_accessed = 4 * (w_all.size + b_all.size + xp.size + Bp * padded)
            flops = 2 * Bp * padded * padded * L
            transc = Bp * padded * len(nvec)
            out = pl.pallas_call(
                kernel,
                out_shape=jax.ShapeDtypeStruct((Bp, padded), jnp.float32),
                in_specs=[vmem, vmem, vmem],
                out_specs=vmem,
                compiler_params=pltpu.CompilerParams(
                    vmem_limit_bytes=int(min(64 << 20,
                                             max(4 << 20, 8 * bytes_accessed)))),
                cost_estimate=pl.CostEstimate(
                    flops=int(flops),
                    transcendentals=int(transc),
                    bytes_accessed=int(bytes_accessed)),
            )(xp, w_all, b_all)
            value = out[:, n_logits:n_logits + 1]
            logprobs = []
            start = 0
            for n in nvec:
                logprobs.append(out[:, start:start + n])
                start += n
            return tuple(logprobs), value

        self._forward = jax.jit(_forward)  # cached per (bucketed) batch shape

    def __call__(self, x):
        # torch's x.ndim == 1 path (unbatched Categorical) handled via a batch of 1.
        squeeze = (x.ndim == 1)
        x2d = x[None, :] if squeeze else x
        B = x2d.shape[0]
        # Bucket batch to a multiple of 8: B=1..8 share one compiled kernel.
        Bp = max(8, _round_up(B, 8))
        if Bp == B and x2d.shape[1] == self._din0 and x2d.dtype == jnp.float32:
            xp = x2d                       # main path: zero wrapper-side work
        else:
            xp = jnp.zeros((Bp, self._din0), jnp.float32)
            xp = xp.at[:B, :self.num_inputs].set(x2d.astype(jnp.float32))
        logprobs, value = self._forward(xp, self.w_all, self.b_all)
        if Bp != B:
            logprobs = tuple(lp[:B] for lp in logprobs)
            value = value[:B]
        dists = [lp[0] if squeeze else lp for lp in logprobs]
        return dists, (value[0] if squeeze else value)

    # Pure-JAX reference for correctness checking.
    def reference(self, x):
        squeeze = (x.ndim == 1)
        if squeeze:
            x = x[None, :]
        h = x.astype(jnp.float32)
        for (w, b) in self.shared_params:
            h = jnp.maximum(h @ w + b, 0.0)
        c = h
        for i, (w, b) in enumerate(self.critic_params):
            c = c @ w + b
            if i < len(self.critic_params) - 1:
                c = jnp.maximum(c, 0.0)
        a = h
        for i, (w, b) in enumerate(self.actor_params):
            a = a @ w + b
            if i < len(self.actor_params) - 1:
                a = jnp.maximum(a, 0.0)
        dists, start = [], 0
        for n in self.nvec:
            lp = jax.nn.log_softmax(a[:, start:start + n], axis=-1)
            dists.append(lp[0] if squeeze else lp)
            start += n
        return dists, (c[0] if squeeze else c)


if __name__ == "__main__":
    key = jax.random.PRNGKey(0)
    key, xkey = jax.random.split(key)

    num_inputs = 32
    nvec_outputs = [3, 4]
    shared_sizes = [64, 32]
    critic_sizes = [32]
    actor_sizes = [32]
    batch = 8

    model = ActorCriticPallas(num_inputs, nvec_outputs, shared_sizes,
                              critic_sizes, actor_sizes, key)

    x = jax.random.normal(xkey, (batch, num_inputs), dtype=jnp.float32)

    dists, value = model(x)
    jax.block_until_ready(value)
    for d in dists:
        jax.block_until_ready(d)

    # silent correctness check against pure-JAX reference (batched + unbatched)
    ref_dists, ref_value = model.reference(x)
    np.testing.assert_allclose(np.asarray(value), np.asarray(ref_value),
                               rtol=1e-5, atol=1e-5)
    for d, rd in zip(dists, ref_dists):
        np.testing.assert_allclose(np.asarray(d), np.asarray(rd),
                                   rtol=1e-5, atol=1e-5)

    d1, v1 = model(x[0])
    rd1, rv1 = model.reference(x[0])
    np.testing.assert_allclose(np.asarray(v1), np.asarray(rv1), rtol=1e-5, atol=1e-5)
    for d, rd in zip(d1, rd1):
        np.testing.assert_allclose(np.asarray(d), np.asarray(rd), rtol=1e-5, atol=1e-5)

    print("KERNEL_OK")
</pallas_src>

<mosaic_0001>
module attributes {stable_mosaic.version = 11 : i64} {
  func.func @kernel(%arg0: memref<8x32xf32, #tpu.memory_space<vmem>>, %arg1: memref<4x128x128xf32, #tpu.memory_space<vmem>>, %arg2: memref<4x8x128xf32, #tpu.memory_space<vmem>>, %arg3: memref<8x128xf32, #tpu.memory_space<vmem>>) attributes {dimension_semantics = [], scalar_prefetch = 0 : i64, scratch_operands = 0 : i64, tpu.core_type = #tpu.core_type<tc>} {
    %c0 = arith.constant 0 : index
    %c0_0 = arith.constant 0 : index
    %0 = vector.load %arg0[%c0, %c0_0] : memref<8x32xf32, #tpu.memory_space<vmem>>, vector<8x32xf32>
    %c0_1 = arith.constant 0 : index
    %c0_2 = arith.constant 0 : index
    %c0_3 = arith.constant 0 : index
    %1 = vector.load %arg1[%c0_1, %c0_2, %c0_3] : memref<4x128x128xf32, #tpu.memory_space<vmem>>, vector<1x32x128xf32>
    %2 = vector.shape_cast %1 : vector<1x32x128xf32> to vector<32x128xf32>
    %cst = arith.constant dense<0.000000e+00> : vector<8x128xf32>
    %3 = tpu.matmul %0, %2, %cst {dimension_numbers = #tpu.dot_dimension_numbers<[1], [0], [0], [1], [0, 0, 1, 1], [], []>} : vector<8x32xf32>, vector<32x128xf32>, vector<8x128xf32> -> vector<8x128xf32>
    %c0_4 = arith.constant 0 : index
    %c0_5 = arith.constant 0 : index
    %c0_6 = arith.constant 0 : index
    %4 = vector.load %arg2[%c0_4, %c0_5, %c0_6] : memref<4x8x128xf32, #tpu.memory_space<vmem>>, vector<1x1x128xf32>
    %5 = vector.shape_cast %4 : vector<1x1x128xf32> to vector<1x128xf32>
    %6 = vector.broadcast %5 : vector<1x128xf32> to vector<8x128xf32>
    %7 = arith.addf %3, %6 : vector<8x128xf32>
    %cst_7 = arith.constant 0.000000e+00 : f32
    %8 = vector.broadcast %cst_7 : f32 to vector<8x128xf32>
    %9 = arith.maximumf %7, %8 : vector<8x128xf32>
    %c1 = arith.constant 1 : index
    %c0_8 = arith.constant 0 : index
    %c0_9 = arith.constant 0 : index
    %10 = vector.load %arg1[%c1, %c0_8, %c0_9] : memref<4x128x128xf32, #tpu.memory_space<vmem>>, vector<1x128x128xf32>
    %11 = vector.shape_cast %10 : vector<1x128x128xf32> to vector<128x128xf32>
    %cst_10 = arith.constant dense<0.000000e+00> : vector<8x128xf32>
    %12 = tpu.matmul %9, %11, %cst_10 {dimension_numbers = #tpu.dot_dimension_numbers<[1], [0], [0], [1], [0, 0, 1, 1], [], []>} : vector<8x128xf32>, vector<128x128xf32>, vector<8x128xf32> -> vector<8x128xf32>
    %c1_11 = arith.constant 1 : index
    %c0_12 = arith.constant 0 : index
    %c0_13 = arith.constant 0 : index
    %13 = vector.load %arg2[%c1_11, %c0_12, %c0_13] : memref<4x8x128xf32, #tpu.memory_space<vmem>>, vector<1x1x128xf32>
    %14 = vector.shape_cast %13 : vector<1x1x128xf32> to vector<1x128xf32>
    %15 = vector.broadcast %14 : vector<1x128xf32> to vector<8x128xf32>
    %16 = arith.addf %12, %15 : vector<8x128xf32>
    %cst_14 = arith.constant 0.000000e+00 : f32
    %17 = vector.broadcast %cst_14 : f32 to vector<8x128xf32>
    %18 = arith.maximumf %16, %17 : vector<8x128xf32>
    %c2 = arith.constant 2 : index
    %c0_15 = arith.constant 0 : index
    %c0_16 = arith.constant 0 : index
    %19 = vector.load %arg1[%c2, %c0_15, %c0_16] : memref<4x128x128xf32, #tpu.memory_space<vmem>>, vector<1x128x128xf32>
    %20 = vector.shape_cast %19 : vector<1x128x128xf32> to vector<128x128xf32>
    %cst_17 = arith.constant dense<0.000000e+00> : vector<8x128xf32>
    %21 = tpu.matmul %18, %20, %cst_17 {dimension_numbers = #tpu.dot_dimension_numbers<[1], [0], [0], [1], [0, 0, 1, 1], [], []>} : vector<8x128xf32>, vector<128x128xf32>, vector<8x128xf32> -> vector<8x128xf32>
    %c2_18 = arith.constant 2 : index
    %c0_19 = arith.constant 0 : index
    %c0_20 = arith.constant 0 : index
    %22 = vector.load %arg2[%c2_18, %c0_19, %c0_20] : memref<4x8x128xf32, #tpu.memory_space<vmem>>, vector<1x1x128xf32>
    %23 = vector.shape_cast %22 : vector<1x1x128xf32> to vector<1x128xf32>
    %24 = vector.broadcast %23 : vector<1x128xf32> to vector<8x128xf32>
    %25 = arith.addf %21, %24 : vector<8x128xf32>
    %cst_21 = arith.constant 0.000000e+00 : f32
    %26 = vector.broadcast %cst_21 : f32 to vector<8x128xf32>
    %27 = arith.maximumf %25, %26 : vector<8x128xf32>
    %c3 = arith.constant 3 : index
    %c0_22 = arith.constant 0 : index
    %c0_23 = arith.constant 0 : index
    %28 = vector.load %arg1[%c3, %c0_22, %c0_23] : memref<4x128x128xf32, #tpu.memory_space<vmem>>, vector<1x128x128xf32>
    %29 = vector.shape_cast %28 : vector<1x128x128xf32> to vector<128x128xf32>
    %cst_24 = arith.constant dense<0.000000e+00> : vector<8x128xf32>
    %30 = tpu.matmul %27, %29, %cst_24 {dimension_numbers = #tpu.dot_dimension_numbers<[1], [0], [0], [1], [0, 0, 1, 1], [], []>} : vector<8x128xf32>, vector<128x128xf32>, vector<8x128xf32> -> vector<8x128xf32>
    %c3_25 = arith.constant 3 : index
    %c0_26 = arith.constant 0 : index
    %c0_27 = arith.constant 0 : index
    %31 = vector.load %arg2[%c3_25, %c0_26, %c0_27] : memref<4x8x128xf32, #tpu.memory_space<vmem>>, vector<1x1x128xf32>
    %32 = vector.shape_cast %31 : vector<1x1x128xf32> to vector<1x128xf32>
    %33 = vector.broadcast %32 : vector<1x128xf32> to vector<8x128xf32>
    %34 = arith.addf %30, %33 : vector<8x128xf32>
    %35 = tpu.iota {dimensions = array<i32: 1>} : vector<1x128xi32>
    %cst_28 = arith.constant 0.000000e+00 : f32
    %36 = vector.broadcast %cst_28 : f32 to vector<8x128xf32>
    %c0_i32 = arith.constant 0 : i32
    %37 = vector.broadcast %c0_i32 : i32 to vector<1x128xi32>
    %38 = arith.cmpi sge, %35, %37 : vector<1x128xi32>
    %c3_i32 = arith.constant 3 : i32
    %39 = vector.broadcast %c3_i32 : i32 to vector<1x128xi32>
    %40 = arith.cmpi slt, %35, %39 : vector<1x128xi32>
    %41 = arith.andi %38, %40 : vector<1x128xi1>
    %cst_29 = arith.constant 0xFF800000 : f32
    %42 = vector.shape_cast %41 : vector<1x128xi1> to vector<1x128xi1>
    %43 = vector.broadcast %42 : vector<1x128xi1> to vector<8x128xi1>
    %44 = vector.broadcast %cst_29 : f32 to vector<8x128xf32>
    %45 = arith.select %43, %34, %44 : vector<8x128xi1>, vector<8x128xf32>
    %cst_30 = arith.constant dense<0xFF800000> : vector<8xf32>
    %46 = vector.multi_reduction <maximumf>, %45, %cst_30 [1] : vector<8x128xf32> to vector<8xf32>
    %47 = vector.shape_cast %46 : vector<8xf32> to vector<8x1xf32>
    %48 = vector.broadcast %47 : vector<8x1xf32> to vector<8x128xf32>
    %49 = arith.subf %45, %48 : vector<8x128xf32>
    %50 = math.exp %49 : vector<8x128xf32>
    %cst_31 = arith.constant dense<0.000000e+00> : vector<8xf32>
    %51 = vector.multi_reduction <add>, %50, %cst_31 [1] : vector<8x128xf32> to vector<8xf32>
    %52 = vector.shape_cast %51 : vector<8xf32> to vector<8x1xf32>
    %53 = math.log %52 : vector<8x1xf32>
    %54 = arith.addf %47, %53 : vector<8x1xf32>
    %cst_32 = arith.constant 0.000000e+00 : f32
    %55 = vector.shape_cast %41 : vector<1x128xi1> to vector<1x128xi1>
    %56 = vector.broadcast %55 : vector<1x128xi1> to vector<8x128xi1>
    %57 = vector.shape_cast %54 : vector<8x1xf32> to vector<8x1xf32>
    %58 = vector.broadcast %57 : vector<8x1xf32> to vector<8x128xf32>
    %59 = vector.broadcast %cst_32 : f32 to vector<8x128xf32>
    %60 = arith.select %56, %58, %59 : vector<8x128xi1>, vector<8x128xf32>
    %61 = arith.addf %36, %60 : vector<8x128xf32>
    %c3_i32_33 = arith.constant 3 : i32
    %62 = vector.broadcast %c3_i32_33 : i32 to vector<1x128xi32>
    %63 = arith.cmpi sge, %35, %62 : vector<1x128xi32>
    %c7_i32 = arith.constant 7 : i32
    %64 = vector.broadcast %c7_i32 : i32 to vector<1x128xi32>
    %65 = arith.cmpi slt, %35, %64 : vector<1x128xi32>
    %66 = arith.andi %63, %65 : vector<1x128xi1>
    %cst_34 = arith.constant 0xFF800000 : f32
    %67 = vector.shape_cast %66 : vector<1x128xi1> to vector<1x128xi1>
    %68 = vector.broadcast %67 : vector<1x128xi1> to vector<8x128xi1>
    %69 = vector.broadcast %cst_34 : f32 to vector<8x128xf32>
    %70 = arith.select %68, %34, %69 : vector<8x128xi1>, vector<8x128xf32>
    %cst_35 = arith.constant dense<0xFF800000> : vector<8xf32>
    %71 = vector.multi_reduction <maximumf>, %70, %cst_35 [1] : vector<8x128xf32> to vector<8xf32>
    %72 = vector.shape_cast %71 : vector<8xf32> to vector<8x1xf32>
    %73 = vector.broadcast %72 : vector<8x1xf32> to vector<8x128xf32>
    %74 = arith.subf %70, %73 : vector<8x128xf32>
    %75 = math.exp %74 : vector<8x128xf32>
    %cst_36 = arith.constant dense<0.000000e+00> : vector<8xf32>
    %76 = vector.multi_reduction <add>, %75, %cst_36 [1] : vector<8x128xf32> to vector<8xf32>
    %77 = vector.shape_cast %76 : vector<8xf32> to vector<8x1xf32>
    %78 = math.log %77 : vector<8x1xf32>
    %79 = arith.addf %72, %78 : vector<8x1xf32>
    %cst_37 = arith.constant 0.000000e+00 : f32
    %80 = vector.shape_cast %66 : vector<1x128xi1> to vector<1x128xi1>
    %81 = vector.broadcast %80 : vector<1x128xi1> to vector<8x128xi1>
    %82 = vector.shape_cast %79 : vector<8x1xf32> to vector<8x1xf32>
    %83 = vector.broadcast %82 : vector<8x1xf32> to vector<8x128xf32>
    %84 = vector.broadcast %cst_37 : f32 to vector<8x128xf32>
    %85 = arith.select %81, %83, %84 : vector<8x128xi1>, vector<8x128xf32>
    %86 = arith.addf %61, %85 : vector<8x128xf32>
    %c7_i32_38 = arith.constant 7 : i32
    %87 = vector.broadcast %c7_i32_38 : i32 to vector<1x128xi32>
    %88 = arith.cmpi slt, %35, %87 : vector<1x128xi32>
    %89 = arith.subf %34, %86 : vector<8x128xf32>
    %90 = vector.shape_cast %88 : vector<1x128xi1> to vector<1x128xi1>
    %91 = vector.broadcast %90 : vector<1x128xi1> to vector<8x128xi1>
    %92 = arith.select %91, %89, %34 : vector<8x128xi1>, vector<8x128xf32>
    %c0_39 = arith.constant 0 : index
    %c0_40 = arith.constant 0 : index
    %93 = vector.load %arg3[%c0_39, %c0_40] : memref<8x128xf32, #tpu.memory_space<vmem>>, vector<8x128xf32>
    tpu.vector_store %arg3[%c0_39, %c0_40], %92 {strides = array<i32>} : memref<8x128xf32, #tpu.memory_space<vmem>>, vector<8x128xf32>,
    return
  }
}

</mosaic_0001>

<llo_original>
// kernel: _forward.1
$region0: #{_forward.1}
  #allocation0 [shape = 'u32[]', space=smem, size = 0x4, offset = 0x4, fixed_abs, tag = 'smem constant byte address 0x4 - core index']
  #allocation1 [shape = 'u32[144,128]{1,0:T(1,128)}', space=vmem, size = 0x12000, scoped, tag = 'internal scratch']
  %s0 = inlined_call_operand.hbm [shape: f32[8,32], index: 0, kind: input, shape index: {}]
  %s1 = inlined_call_operand.hbm [shape: f32[4,128,128], index: 1, kind: input, shape index: {}]
  %s2 = inlined_call_operand.hbm [shape: f32[4,8,128], index: 2, kind: input, shape index: {}]
  %s3 = inlined_call_operand.vmem [shape: f32[8,128], index: 3, kind: output, shape index: {}]
  %s4 = sld [smem:[#allocation0]]
  $region34: #{_forward.1} parent=0
    _
  %s6 = ssub.s32 1, %s4
  %s7 = scalar_select 0, %s6, %s4
  $region1: #{_forward.1} parent=0
    #allocation2 [shape = 'u8[4096]{0}', space=vmem, size = 0x1000, scoped, tag = 'input window, operand 0, single buffered']
    #allocation3 [shape = 's32[1]{0}', space=sflag, size = 0x4, scoped, tag = 'scoped memory for _forward.1']
    #allocation4 [shape = 'u8[262144]{0}', space=vmem, size = 0x40000, scoped, tag = 'input window, operand 1, single buffered']
    #allocation5 [shape = 's32[1]{0}', space=sflag, size = 0x4, scoped, tag = 'scoped memory for _forward.1']
    #allocation6 [shape = 'u8[16384]{0}', space=vmem, size = 0x4000, scoped, tag = 'input window, operand 2, single buffered']
    %8 = vsyncpa [#allocation3], 0
    %9 = vsyncpa [#allocation5], 0
    // Predicated region
    $region2: #{_forward.1} parent=1 // pred_check
      _
    $region3: #{_forward.1} parent=1 // pred_check_branch
      %11 = sbr.rel (0) target = $region5
    $region4: #{_forward.1} parent=1 // pred_region
      %s13 = ssub.s32 128, 128
      %14 = vsyncadd [#allocation3], %s13
      %s16 = sshll.u32 [#allocation2], 4
      %s17 = int_to_ptr.vmem [resolvable:$true] %s16
      %19 = dma.hbm_to_vmem [thread:$0]  %s0, 128, %s17, [#allocation3]
    $region5: #{_forward.1} parent=1 // pred_fallthru
      _
    // Predicated region
    $region6: #{_forward.1} parent=1 // pred_check
      _
    $region7: #{_forward.1} parent=1 // pred_check_branch
      %21 = sbr.rel (0) target = $region9
    $region8: #{_forward.1} parent=1 // pred_region
      %s23 = ssub.s32 8192, 8192
      %24 = vsyncadd [#allocation5], %s23
      %s25 = sshll.u32 [#allocation4], 4
      %s26 = int_to_ptr.vmem [resolvable:$true] %s25
      %31 = dma.hbm_to_vmem [thread:$0]  %s1, 8192, %s26, [#allocation5], 128, 128, 8
    $region9: #{_forward.1} parent=1 // pred_fallthru
      _
    // Predicated region
    $region10: #{_forward.1} parent=1 // pred_check
      _
    $region11: #{_forward.1} parent=1 // pred_check_branch
      %33 = sbr.rel (0) target = $region13
    $region12: #{_forward.1} parent=1 // pred_region
      %s35 = ssub.s32 512, 512
      %36 = vsyncadd [#allocation5], %s35
      %s37 = sshll.u32 [#allocation6], 4
      %s38 = int_to_ptr.vmem [resolvable:$true] %s37
      %43 = dma.hbm_to_vmem [thread:$0]  %s2, 512, %s38, [#allocation5], 128, 128, 8
    $region13: #{_forward.1} parent=1 // pred_fallthru
      _
    // Predicated region
    $region14: #{_forward.1} parent=1 // pred_check
      _
    $region15: #{_forward.1} parent=1 // pred_check_branch
      %45 = sbr.rel (0) target = $region17
    $region16: #{_forward.1} parent=1 // pred_region
      %46 = dma.done [#allocation3], 128
    $region17: #{_forward.1} parent=1 // pred_fallthru
      _
    // Predicated region
    $region18: #{_forward.1} parent=1 // pred_check
      _
    $region19: #{_forward.1} parent=1 // pred_check_branch
      %48 = sbr.rel (0) target = $region21
    $region20: #{_forward.1} parent=1 // pred_region
      %49 = dma.done [#allocation5], 8192
    $region21: #{_forward.1} parent=1 // pred_fallthru
      _
    // Predicated region
    $region22: #{_forward.1} parent=1 // pred_check
      _
    $region23: #{_forward.1} parent=1 // pred_check_branch
      %51 = sbr.rel (0) target = $region25
    $region24: #{_forward.1} parent=1 // pred_region
      %52 = dma.done [#allocation5], 512
    $region25: #{_forward.1} parent=1 // pred_fallthru
      _
    %v53 = vld [vmem:[#allocation2] sm:$0xff]
    %v54 = vld [vmem:[#allocation4] sm:$0xff]
    %v55 = vld [vmem:[#allocation4 + $0x8] sm:$0xff]
    %v56 = vld [vmem:[#allocation4 + $0x10] sm:$0xff]
    %v57 = vld [vmem:[#allocation4 + $0x18] sm:$0xff]
    %v58 = vld [vmem:[#allocation6] sm:$0x1]
    %v59 = vlaneseq
    %v60 = vshrl.u32 %v59, 7
    %v61 = vsub.s32 0, %v60
    %v62 = vrot.slane %v58, %v61
    %vm63 = vcmask 261120
    %v65 = vsel %vm63, %v53, 0
    %67 = vmatprep.subr.mxu0 0.0
    %68 = vmatpush1.msra.mxu0 %v54
    %69 = vmatprep.subr.mxu0 0.0
    %70 = vmatpush1.msra.mxu0 %v55
    %71 = vmatprep.subr.mxu0 0.0
    %72 = vmatpush1.msra.mxu0 %v56
    %73 = vmatprep.subr.mxu0 0.0
    %74 = vmatpush1.msra.mxu0 %v57
    %75 = vmatprep.subr.mxu0 0.0
    %76 = vmatpush1.msra.mxu0 0.0
    %77 = vmatprep.subr.mxu0 0.0
    %78 = vmatpush1.msra.mxu0 0.0
    %79 = vmatprep.subr.mxu0 0.0
    %80 = vmatpush1.msra.mxu0 0.0
    %81 = vmatprep.subr.mxu0 0.0
    %82 = vmatpush1.msra.mxu0 0.0
    %83 = vmatprep.subr.mxu0 0.0
    %84 = vmatpush1.msra.mxu0 0.0
    %85 = vmatprep.subr.mxu0 0.0
    %86 = vmatpush1.msra.mxu0 0.0
    %87 = vmatprep.subr.mxu0 0.0
    %88 = vmatpush1.msra.mxu0 0.0
    %89 = vmatprep.subr.mxu0 0.0
    %90 = vmatpush1.msra.mxu0 0.0
    %91 = vmatprep.subr.mxu0 0.0
    %92 = vmatpush1.msra.mxu0 0.0
    %93 = vmatprep.subr.mxu0 0.0
    %94 = vmatpush1.msra.mxu0 0.0
    %95 = vmatprep.subr.mxu0 0.0
    %96 = vmatpush1.msra.mxu0 0.0
    %97 = vmatprep.subr.mxu0 0.0
    %98 = vmatpush1.msra.mxu0 0.0
    %99 = vmatprep.subr.mxu0 0.0
    %100 = vmatpush1.msra.mxu0 0.0
    %101 = vmatprep.subr.mxu0 0.0
    %102 = vmatpush1.msra.mxu0 0.0
    %103 = vmatprep.subr.mxu0 0.0
    %104 = vmatpush1.msra.mxu0 0.0
    %105 = vmatprep.subr.mxu0 0.0
    %106 = vmatpush1.msra.mxu0 0.0
    %107 = vmatprep.subr.mxu0 0.0
    %108 = vmatpush1.msra.mxu0 0.0
    %109 = vmatprep.subr.mxu0 0.0
    %110 = vmatpush1.msra.mxu0 0.0
    %111 = vmatprep.subr.mxu0 0.0
    %112 = vmatpush1.msra.mxu0 0.0
    %113 = vmatprep.subr.mxu0 0.0
    %114 = vmatpush1.msra.mxu0 0.0
    %115 = vmatprep.subr.mxu0 0.0
    %116 = vmatpush1.msra.mxu0 0.0
    %117 = vmatprep.subr.mxu0 0.0
    %118 = vmatpush1.msra.mxu0 0.0
    %119 = vmatprep.subr.mxu0 0.0
    %120 = vmatpush1.msra.mxu0 0.0
    %121 = vmatprep.subr.mxu0 0.0
    %122 = vmatpush1.msra.mxu0 0.0
    %123 = vmatprep.subr.mxu0 0.0
    %124 = vmatpush1.msra.mxu0 0.0
    %125 = vmatprep.subr.mxu0 0.0
    %126 = vmatpush1.msra.mxu0 0.0
    %127 = vmatprep.subr.mxu0 0.0
    %128 = vmatpush1.msra.mxu0 0.0
    %129 = vmatprep.subr.mxu0 0.0
    %130 = vmatpush1.msra.mxu0 0.0
    %131 = vmatprep.mubr.f32.mxu0 0.0
    %132 = vmatmul.mubr.f32.gmra.mrb[0].mxu0 %v65
    %v133 = vpop.f32.mrb[0].mxu0
    %v134 = vadd.f32 %v62, %v133
    %v135 = vpop.f32.mrb[0].mxu0
    %136 = vdwg.mxu0
    %v137 = vmax.f32 %v134, 0.0
    %s138 = scalar_lea.vmem [#allocation4], 128
    %v139 = vld [vmem:[%s138] sm:$0xff]
    %v140 = vld [vmem:[%s138 + $0x8] sm:$0xff]
    %v141 = vld [vmem:[%s138 + $0x10] sm:$0xff]
    %v142 = vld [vmem:[%s138 + $0x18] sm:$0xff]
    %v143 = vld [vmem:[%s138 + $0x20] sm:$0xff]
    %v144 = vld [vmem:[%s138 + $0x28] sm:$0xff]
    %v145 = vld [vmem:[%s138 + $0x30] sm:$0xff]
    %v146 = vld [vmem:[%s138 + $0x38] sm:$0xff]
    %v147 = vld [vmem:[%s138 + $0x40] sm:$0xff]
    %v148 = vld [vmem:[%s138 + $0x48] sm:$0xff]
    %v149 = vld [vmem:[%s138 + $0x50] sm:$0xff]
    %v150 = vld [vmem:[%s138 + $0x58] sm:$0xff]
    %v151 = vld [vmem:[%s138 + $0x60] sm:$0xff]
    %v152 = vld [vmem:[%s138 + $0x68] sm:$0xff]
    %v153 = vld [vmem:[%s138 + $0x70] sm:$0xff]
    %v154 = vld [vmem:[%s138 + $0x78] sm:$0xff]
    %s155 = scalar_lea.vmem [#allocation6], 8
    %v156 = vld [vmem:[%s155] sm:$0x1]
    %v157 = vlaneseq
    %v158 = vshrl.u32 %v157, 7
    %v159 = vsub.s32 0, %v158
    %v160 = vrot.slane %v156, %v159
    %161 = vmatprep.subr.mxu0 0.0
    %162 = vmatpush1.msra.mxu0 %v139
    %163 = vmatprep.subr.mxu0 0.0
    %164 = vmatpush1.msra.mxu0 %v140
    %165 = vmatprep.subr.mxu0 0.0
    %166 = vmatpush1.msra.mxu0 %v141
    %167 = vmatprep.subr.mxu0 0.0
    %168 = vmatpush1.msra.mxu0 %v142
    %169 = vmatprep.subr.mxu0 0.0
    %170 = vmatpush1.msra.mxu0 %v143
    %171 = vmatprep.subr.mxu0 0.0
    %172 = vmatpush1.msra.mxu0 %v144
    %173 = vmatprep.subr.mxu0 0.0
    %174 = vmatpush1.msra.mxu0 %v145
    %175 = vmatprep.subr.mxu0 0.0
    %176 = vmatpush1.msra.mxu0 %v146
    %177 = vmatprep.subr.mxu0 0.0
    %178 = vmatpush1.msra.mxu0 %v147
    %179 = vmatprep.subr.mxu0 0.0
    %180 = vmatpush1.msra.mxu0 %v148
    %181 = vmatprep.subr.mxu0 0.0
    %182 = vmatpush1.msra.mxu0 %v149
    %183 = vmatprep.subr.mxu0 0.0
    %184 = vmatpush1.msra.mxu0 %v150
    %185 = vmatprep.subr.mxu0 0.0
    %186 = vmatpush1.msra.mxu0 %v151
    %187 = vmatprep.subr.mxu0 0.0
    %188 = vmatpush1.msra.mxu0 %v152
    %189 = vmatprep.subr.mxu0 0.0
    %190 = vmatpush1.msra.mxu0 %v153
    %191 = vmatprep.subr.mxu0 0.0
    %192 = vmatpush1.msra.mxu0 %v154
    %193 = vmatprep.subr.mxu0 0.0
    %194 = vmatpush1.msra.mxu0 0.0
    %195 = vmatprep.subr.mxu0 0.0
    %196 = vmatpush1.msra.mxu0 0.0
    %197 = vmatprep.subr.mxu0 0.0
    %198 = vmatpush1.msra.mxu0 0.0
    %199 = vmatprep.subr.mxu0 0.0
    %200 = vmatpush1.msra.mxu0 0.0
    %201 = vmatprep.subr.mxu0 0.0
    %202 = vmatpush1.msra.mxu0 0.0
    %203 = vmatprep.subr.mxu0 0.0
    %204 = vmatpush1.msra.mxu0 0.0
    %205 = vmatprep.subr.mxu0 0.0
    %206 = vmatpush1.msra.mxu0 0.0
    %207 = vmatprep.subr.mxu0 0.0
    %208 = vmatpush1.msra.mxu0 0.0
    %209 = vmatprep.subr.mxu0 0.0
    %210 = vmatpush1.msra.mxu0 0.0
    %211 = vmatprep.subr.mxu0 0.0
    %212 = vmatpush1.msra.mxu0 0.0
    %213 = vmatprep.subr.mxu0 0.0
    %214 = vmatpush1.msra.mxu0 0.0
    %215 = vmatprep.subr.mxu0 0.0
    %216 = vmatpush1.msra.mxu0 0.0
    %217 = vmatprep.subr.mxu0 0.0
    %218 = vmatpush1.msra.mxu0 0.0
    %219 = vmatprep.subr.mxu0 0.0
    %220 = vmatpush1.msra.mxu0 0.0
    %221 = vmatprep.subr.mxu0 0.0
    %222 = vmatpush1.msra.mxu0 0.0
    %223 = vmatprep.subr.mxu0 0.0
    %224 = vmatpush1.msra.mxu0 0.0
    %225 = vmatprep.mubr.f32.mxu0 0.0
    %226 = vmatmul.mubr.f32.gmra.mrb[0].mxu0 %v137
    %v227 = vpop.f32.mrb[0].mxu0
    %v228 = vadd.f32 %v160, %v227
    %v229 = vpop.f32.mrb[0].mxu0
    %230 = vdwg.mxu0
    %v231 = vmax.f32 %v228, 0.0
    %s232 = scalar_lea.vmem [#allocation4], 256
    %v233 = vld [vmem:[%s232] sm:$0xff]
    %v234 = vld [vmem:[%s232 + $0x8] sm:$0xff]
    %v235 = vld [vmem:[%s232 + $0x10] sm:$0xff]
    %v236 = vld [vmem:[%s232 + $0x18] sm:$0xff]
    %v237 = vld [vmem:[%s232 + $0x20] sm:$0xff]
    %v238 = vld [vmem:[%s232 + $0x28] sm:$0xff]
    %v239 = vld [vmem:[%s232 + $0x30] sm:$0xff]
    %v240 = vld [vmem:[%s232 + $0x38] sm:$0xff]
    %v241 = vld [vmem:[%s232 + $0x40] sm:$0xff]
    %v242 = vld [vmem:[%s232 + $0x48] sm:$0xff]
    %v243 = vld [vmem:[%s232 + $0x50] sm:$0xff]
    %v244 = vld [vmem:[%s232 + $0x58] sm:$0xff]
    %v245 = vld [vmem:[%s232 + $0x60] sm:$0xff]
    %v246 = vld [vmem:[%s232 + $0x68] sm:$0xff]
    %v247 = vld [vmem:[%s232 + $0x70] sm:$0xff]
    %v248 = vld [vmem:[%s232 + $0x78] sm:$0xff]
    %s249 = scalar_lea.vmem [#allocation6], 16
    %v250 = vld [vmem:[%s249] sm:$0x1]
    %v251 = vlaneseq
    %v252 = vshrl.u32 %v251, 7
    %v253 = vsub.s32 0, %v252
    %v254 = vrot.slane %v250, %v253
    %255 = vmatprep.subr.mxu0 0.0
    %256 = vmatpush1.msra.mxu0 %v233
    %257 = vmatprep.subr.mxu0 0.0
    %258 = vmatpush1.msra.mxu0 %v234
    %259 = vmatprep.subr.mxu0 0.0
    %260 = vmatpush1.msra.mxu0 %v235
    %261 = vmatprep.subr.mxu0 0.0
    %262 = vmatpush1.msra.mxu0 %v236
    %263 = vmatprep.subr.mxu0 0.0
    %264 = vmatpush1.msra.mxu0 %v237
    %265 = vmatprep.subr.mxu0 0.0
    %266 = vmatpush1.msra.mxu0 %v238
    %267 = vmatprep.subr.mxu0 0.0
    %268 = vmatpush1.msra.mxu0 %v239
    %269 = vmatprep.subr.mxu0 0.0
    %270 = vmatpush1.msra.mxu0 %v240
    %271 = vmatprep.subr.mxu0 0.0
    %272 = vmatpush1.msra.mxu0 %v241
    %273 = vmatprep.subr.mxu0 0.0
    %274 = vmatpush1.msra.mxu0 %v242
    %275 = vmatprep.subr.mxu0 0.0
    %276 = vmatpush1.msra.mxu0 %v243
    %277 = vmatprep.subr.mxu0 0.0
    %278 = vmatpush1.msra.mxu0 %v244
    %279 = vmatprep.subr.mxu0 0.0
    %280 = vmatpush1.msra.mxu0 %v245
    %281 = vmatprep.subr.mxu0 0.0
    %282 = vmatpush1.msra.mxu0 %v246
    %283 = vmatprep.subr.mxu0 0.0
    %284 = vmatpush1.msra.mxu0 %v247
    %285 = vmatprep.subr.mxu0 0.0
    %286 = vmatpush1.msra.mxu0 %v248
    %287 = vmatprep.subr.mxu0 0.0
    %288 = vmatpush1.msra.mxu0 0.0
    %289 = vmatprep.subr.mxu0 0.0
    %290 = vmatpush1.msra.mxu0 0.0
    %291 = vmatprep.subr.mxu0 0.0
    %292 = vmatpush1.msra.mxu0 0.0
    %293 = vmatprep.subr.mxu0 0.0
    %294 = vmatpush1.msra.mxu0 0.0
    %295 = vmatprep.subr.mxu0 0.0
    %296 = vmatpush1.msra.mxu0 0.0
    %297 = vmatprep.subr.mxu0 0.0
    %298 = vmatpush1.msra.mxu0 0.0
    %299 = vmatprep.subr.mxu0 0.0
    %300 = vmatpush1.msra.mxu0 0.0
    %301 = vmatprep.subr.mxu0 0.0
    %302 = vmatpush1.msra.mxu0 0.0
    %303 = vmatprep.subr.mxu0 0.0
    %304 = vmatpush1.msra.mxu0 0.0
    %305 = vmatprep.subr.mxu0 0.0
    %306 = vmatpush1.msra.mxu0 0.0
    %307 = vmatprep.subr.mxu0 0.0
    %308 = vmatpush1.msra.mxu0 0.0
    %309 = vmatprep.subr.mxu0 0.0
    %310 = vmatpush1.msra.mxu0 0.0
    %311 = vmatprep.subr.mxu0 0.0
    %312 = vmatpush1.msra.mxu0 0.0
    %313 = vmatprep.subr.mxu0 0.0
    %314 = vmatpush1.msra.mxu0 0.0
    %315 = vmatprep.subr.mxu0 0.0
    %316 = vmatpush1.msra.mxu0 0.0
    %317 = vmatprep.subr.mxu0 0.0
    %318 = vmatpush1.msra.mxu0 0.0
    %319 = vmatprep.mubr.f32.mxu0 0.0
    %320 = vmatmul.mubr.f32.gmra.mrb[0].mxu0 %v231
    %v321 = vpop.f32.mrb[0].mxu0
    %v322 = vadd.f32 %v254, %v321
    %v323 = vpop.f32.mrb[0].mxu0
    %324 = vdwg.mxu0
    %v325 = vmax.f32 %v322, 0.0
    %s326 = scalar_lea.vmem [#allocation4], 384
    %v327 = vld [vmem:[%s326] sm:$0xff]
    %v328 = vld [vmem:[%s326 + $0x8] sm:$0xff]
    %v329 = vld [vmem:[%s326 + $0x10] sm:$0xff]
    %v330 = vld [vmem:[%s326 + $0x18] sm:$0xff]
    %v331 = vld [vmem:[%s326 + $0x20] sm:$0xff]
    %v332 = vld [vmem:[%s326 + $0x28] sm:$0xff]
    %v333 = vld [vmem:[%s326 + $0x30] sm:$0xff]
    %v334 = vld [vmem:[%s326 + $0x38] sm:$0xff]
    %v335 = vld [vmem:[%s326 + $0x40] sm:$0xff]
    %v336 = vld [vmem:[%s326 + $0x48] sm:$0xff]
    %v337 = vld [vmem:[%s326 + $0x50] sm:$0xff]
    %v338 = vld [vmem:[%s326 + $0x58] sm:$0xff]
    %v339 = vld [vmem:[%s326 + $0x60] sm:$0xff]
    %v340 = vld [vmem:[%s326 + $0x68] sm:$0xff]
    %v341 = vld [vmem:[%s326 + $0x70] sm:$0xff]
    %v342 = vld [vmem:[%s326 + $0x78] sm:$0xff]
    %s343 = scalar_lea.vmem [#allocation6], 24
    %v344 = vld [vmem:[%s343] sm:$0x1]
    %v345 = vlaneseq
    %v346 = vshrl.u32 %v345, 7
    %v347 = vsub.s32 0, %v346
    %v348 = vrot.slane %v344, %v347
    %349 = vmatprep.subr.mxu0 0.0
    %350 = vmatpush1.msra.mxu0 %v327
    %351 = vmatprep.subr.mxu0 0.0
    %352 = vmatpush1.msra.mxu0 %v328
    %353 = vmatprep.subr.mxu0 0.0
    %354 = vmatpush1.msra.mxu0 %v329
    %355 = vmatprep.subr.mxu0 0.0
    %356 = vmatpush1.msra.mxu0 %v330
    %357 = vmatprep.subr.mxu0 0.0
    %358 = vmatpush1.msra.mxu0 %v331
    %359 = vmatprep.subr.mxu0 0.0
    %360 = vmatpush1.msra.mxu0 %v332
    %361 = vmatprep.subr.mxu0 0.0
    %362 = vmatpush1.msra.mxu0 %v333
    %363 = vmatprep.subr.mxu0 0.0
    %364 = vmatpush1.msra.mxu0 %v334
    %365 = vmatprep.subr.mxu0 0.0
    %366 = vmatpush1.msra.mxu0 %v335
    %367 = vmatprep.subr.mxu0 0.0
    %368 = vmatpush1.msra.mxu0 %v336
    %369 = vmatprep.subr.mxu0 0.0
    %370 = vmatpush1.msra.mxu0 %v337
    %371 = vmatprep.subr.mxu0 0.0
    %372 = vmatpush1.msra.mxu0 %v338
    %373 = vmatprep.subr.mxu0 0.0
    %374 = vmatpush1.msra.mxu0 %v339
    %375 = vmatprep.subr.mxu0 0.0
    %376 = vmatpush1.msra.mxu0 %v340
    %377 = vmatprep.subr.mxu0 0.0
    %378 = vmatpush1.msra.mxu0 %v341
    %379 = vmatprep.subr.mxu0 0.0
    %380 = vmatpush1.msra.mxu0 %v342
    %381 = vmatprep.subr.mxu0 0.0
    %382 = vmatpush1.msra.mxu0 0.0
    %383 = vmatprep.subr.mxu0 0.0
    %384 = vmatpush1.msra.mxu0 0.0
    %385 = vmatprep.subr.mxu0 0.0
    %386 = vmatpush1.msra.mxu0 0.0
    %387 = vmatprep.subr.mxu0 0.0
    %388 = vmatpush1.msra.mxu0 0.0
    %389 = vmatprep.subr.mxu0 0.0
    %390 = vmatpush1.msra.mxu0 0.0
    %391 = vmatprep.subr.mxu0 0.0
    %392 = vmatpush1.msra.mxu0 0.0
    %393 = vmatprep.subr.mxu0 0.0
    %394 = vmatpush1.msra.mxu0 0.0
    %395 = vmatprep.subr.mxu0 0.0
    %396 = vmatpush1.msra.mxu0 0.0
    %397 = vmatprep.subr.mxu0 0.0
    %398 = vmatpush1.msra.mxu0 0.0
    %399 = vmatprep.subr.mxu0 0.0
    %400 = vmatpush1.msra.mxu0 0.0
    %401 = vmatprep.subr.mxu0 0.0
    %402 = vmatpush1.msra.mxu0 0.0
    %403 = vmatprep.subr.mxu0 0.0
    %404 = vmatpush1.msra.mxu0 0.0
    %405 = vmatprep.subr.mxu0 0.0
    %406 = vmatpush1.msra.mxu0 0.0
    %407 = vmatprep.subr.mxu0 0.0
    %408 = vmatpush1.msra.mxu0 0.0
    %409 = vmatprep.subr.mxu0 0.0
    %410 = vmatpush1.msra.mxu0 0.0
    %411 = vmatprep.subr.mxu0 0.0
    %412 = vmatpush1.msra.mxu0 0.0
    %413 = vmatprep.mubr.f32.mxu0 0.0
    %414 = vmatmul.mubr.f32.gmra.mrb[0].mxu0 %v325
    %v415 = vpop.f32.mrb[0].mxu0
    %v416 = vadd.f32 %v348, %v415
    %v417 = vpop.f32.mrb[0].mxu0
    %418 = vdwg.mxu0
    %v419 = vlaneseq
    %v420 = vand.u32 %v419, 127
    %vm421 = vcmp.ge.s32.totalorder %v420, 0
    %vm422 = vcmp.lt.s32.totalorder %v420, 3
    %vm423 = vmand %vm421, %vm422
    %v424 = vsel %vm423, 1, 0
    %vm425 = vcmp.eq.s32.totalorder %v424, 1
    %v426 = vsel %vm425, %v416, -inf
    %427 = vmax.xlane.f32.xlu0 %v426
    %v428 = vpop.xlane.xlu0 %427
    %v429 = vsub.f32 %v426, %v428
    %v430 = vmul.f32 %v429, 1.442695
    %v431 = vpow.pop %v430
    %432 = vadd.xlane.f32.xlu0 %v431
    %v433 = vpop.xlane.xlu0 %432
    %v434 = vlog2.pop %v433
    %v435 = vmul.f32 %v434, 0.6931472
    %v436 = vadd.f32 %v428, %v435
    %v437 = vsel %vm425, %v436, 0.0
    %v438 = vadd.f32 %v437, 0.0
    %vm439 = vcmp.ge.s32.totalorder %v420, 3
    %vm440 = vcmp.lt.s32.totalorder %v420, 7
    %vm441 = vmand %vm439, %vm440
    %v442 = vsel %vm441, 1, 0
    %vm443 = vcmp.eq.s32.totalorder %v442, 1
    %v444 = vsel %vm443, %v416, -inf
    %445 = vmax.xlane.f32.xlu0 %v444
    %v446 = vpop.xlane.xlu0 %445
    %v447 = vsub.f32 %v444, %v446
    %v448 = vmul.f32 %v447, 1.442695
    %v449 = vpow.pop %v448
    %450 = vadd.xlane.f32.xlu0 %v449
    %v451 = vpop.xlane.xlu0 %450
    %v452 = vlog2.pop %v451
    %v453 = vmul.f32 %v452, 0.6931472
    %v454 = vadd.f32 %v446, %v453
    %v455 = vsel %vm443, %v454, 0.0
    %v456 = vadd.f32 %v438, %v455
    %v457 = vsub.f32 %v416, %v456
    %v458 = vsel %vm440, 1, 0
    %vm459 = vcmp.eq.s32.totalorder %v458, 1
    %v460 = vsel %vm459, %v457, %v416
    %461 = vst [vmem:[%s3] sm:$0xff] %v460
    // Predicated region
    $region26: #{_forward.1} parent=1 // pred_check
      _
    $region27: #{_forward.1} parent=1 // pred_check_branch
      %463 = sbr.rel (0) target = $region29
    $region28: #{_forward.1} parent=1 // pred_region
      _
    $region29: #{_forward.1} parent=1 // pred_fallthru
      _
    // Predicated region
    $region30: #{_forward.1} parent=1 // pred_check
      _
    $region31: #{_forward.1} parent=1 // pred_check_branch
      %465 = sbr.rel (0) target = $region33
    $region32: #{_forward.1} parent=1 // pred_region
      _
    $region33: #{_forward.1} parent=1 // pred_fallthru
      _
    %466 = vsyncpa [#allocation3], 1
    %467 = vsyncpa [#allocation5], 1

</llo_original>
